<compile_context>
chip_gen: v5e
topology: v5e:2x2
jax: 0.10.0
libtpu: 0.0.40
codegen_flags: <defaults>
</compile_context>

<pallas_src>
import functools

import jax
import jax.numpy as jnp
from jax import lax
from jax.experimental import pallas as pl
from jax.experimental.pallas import tpu as pltpu

# ---- static block configuration (module __init__ defaults) ----
INPUT_FILTERS = 4
OUTPUT_FILTERS = 8
KSIZE = 3
STRIDE = 2
EXPAND_RATIO = 6
SE_RATIO = 0.25
BN_EPS = 1e-3                                      # InstanceNorm eps

COUP = INPUT_FILTERS * EXPAND_RATIO                # 24 expanded channels
CSQ = max(1, int(INPUT_FILTERS * SE_RATIO))        # 1 squeezed channel
CFIN = OUTPUT_FILTERS                              # 8 output channels
KKC = KSIZE * KSIZE * INPUT_FILTERS                # 36 im2col columns
assert CSQ == 1      # SE reduce is implemented as a VPU reduction (Csq == 1)


def _same_pad(size, k, s):
    """TF-style 'same' padding (as Conv2dStaticSamePadding)."""
    out = -(-size // s)
    pad = max((out - 1) * s + k - size, 0)
    return out, pad // 2, pad - pad // 2


def _num_grid_steps(n):
    """1 grid step on single-TC chips (v5e/v6e); 2 only on 2-TC parts (v7x)."""
    steps = 1
    try:
        kind = jax.devices()[0].device_kind.lower()
        if ("v7" in kind) or ("7x" in kind):
            steps = 2
    except Exception:
        steps = 1
    if steps > n or n % steps != 0:
        steps = 1
    return steps


def _mbconv_kernel(p_ref, we_ref, wr_ref, br_ref, wx_ref, bx_ref, wp_ref,
                   o_ref, *, bchunk):
    """Fused MBConv block for `bchunk` images, channel-major.

    p_ref : (bchunk, K*K*Cin, hw)   im2col patches (spatial on lanes)
    we_ref: (Coup, K*K*Cin)         expand-conv weight (fused over taps)
    wr_ref: (Coup, 1)  br_ref: (1, 1)   SE reduce weight / bias
    wx_ref: (Coup, 1)  bx_ref: (Coup, 1) SE expand weight / bias
    wp_ref: (Cfin, Coup)            project-conv weight
    o_ref : (bchunk, Cfin, hw)      channel-major output (NCHW-flattened)
    """
    # Load the tiny weights once (hoisted out of the per-image loop).
    we = we_ref[...]
    wr = wr_ref[...]
    br = br_ref[...]
    wx = wx_ref[...]
    bx = bx_ref[...]
    wp = wp_ref[...]

    for b in range(bchunk):                        # static unroll: 1 or 2 images
        patches = p_ref[b]                         # (36, hw)

        # ---- _expand_conv: single fused MXU matmul (all 9 taps at once) ----
        x = jnp.dot(we, patches, preferred_element_type=jnp.float32)  # (Coup, hw)

        # ---- _bn0: InstanceNorm2d, two-pass (mu, then E[(x-mu)^2]) ----
        mu = jnp.mean(x, axis=-1, keepdims=True)
        xc = x - mu
        var = jnp.mean(xc * xc, axis=-1, keepdims=True)
        x = xc * lax.rsqrt(var + BN_EPS)

        # ---- Swish ----
        x = x * jax.nn.sigmoid(x)

        # ---- Squeeze-and-Excite (Csq == 1): VPU/XLU only, no M=1 matmuls ----
        s = jnp.mean(x, axis=-1, keepdims=True)                    # (Coup, 1)
        s_red = jnp.sum(s * wr, axis=0, keepdims=True) + br        # (1, 1)
        s_red = s_red * jax.nn.sigmoid(s_red)                      # swish
        s_exp = s_red * wx + bx                                    # (Coup, 1)
        x = jax.nn.sigmoid(s_exp) * x                              # gate over lanes

        # ---- _project_conv: 1x1 conv, no bias (MXU), channel-major result ----
        z = jnp.dot(wp, x, preferred_element_type=jnp.float32)     # (Cfin, hw)

        # ---- _bn2: InstanceNorm2d, two-pass ----
        mu2 = jnp.mean(z, axis=-1, keepdims=True)
        zc = z - mu2
        var2 = jnp.mean(zc * zc, axis=-1, keepdims=True)
        o_ref[b] = zc * lax.rsqrt(var2 + BN_EPS)


@jax.jit
def mbconv_forward(x_nchw, params):
    """Forward of MBConvTransposeBlockV2 (upsample=False, id_skip inactive)."""
    we_mat, wr_vec, br_vec, wx_vec, bx_vec, wp_mat = params
    n, cin, h, w = x_nchw.shape

    ho, pt, pb = _same_pad(h, KSIZE, STRIDE)
    wo, pw0, pw1 = _same_pad(w, KSIZE, STRIDE)
    hw = ho * wo

    # TF-"same" pad (tiny, one XLA fusion together with the im2col below).
    xp = jnp.pad(x_nchw.astype(jnp.float32),
                 ((0, 0), (0, 0), (pt, pb), (pw0, pw1)))

    # im2col in the wrapper: patches[b, (kh*K+kw)*cin + c, i*wo + j]
    #   == xp[b, c, STRIDE*i + kh, STRIDE*j + kw]
    taps = []
    for kh in range(KSIZE):
        for kw in range(KSIZE):
            taps.append(xp[:, :, kh:kh + STRIDE * ho:STRIDE,
                           kw:kw + STRIDE * wo:STRIDE])      # (n, cin, ho, wo)
    p = jnp.stack(taps, axis=1)                              # (n, K*K, cin, ho, wo)
    p = p.reshape(n, KSIZE * KSIZE * cin, hw)                # (n, 36, hw)

    nsteps = _num_grid_steps(n)
    bchunk = n // nsteps

    kernel = functools.partial(_mbconv_kernel, bchunk=bchunk)
    out = pl.pallas_call(
        kernel,
        out_shape=jax.ShapeDtypeStruct((n, CFIN, hw), jnp.float32),
        grid_spec=pltpu.PrefetchScalarGridSpec(
            num_scalar_prefetch=0,
            grid=(nsteps,),
            in_specs=[
                pl.BlockSpec((bchunk, KSIZE * KSIZE * cin, hw),
                             lambda b: (b, 0, 0)),            # im2col patches
                pl.BlockSpec((COUP, KSIZE * KSIZE * cin),
                             lambda b: (0, 0)),               # expand weight
                pl.BlockSpec((COUP, 1), lambda b: (0, 0)),    # se reduce weight
                pl.BlockSpec((1, 1), lambda b: (0, 0)),       # se reduce bias
                pl.BlockSpec((COUP, 1), lambda b: (0, 0)),    # se expand weight
                pl.BlockSpec((COUP, 1), lambda b: (0, 0)),    # se expand bias
                pl.BlockSpec((CFIN, COUP), lambda b: (0, 0)), # project weight
            ],
            out_specs=pl.BlockSpec((bchunk, CFIN, hw), lambda b: (b, 0, 0)),
        ),
        compiler_params=pltpu.CompilerParams(
            dimension_semantics=("parallel",)),
    )(p, we_mat, wr_vec, br_vec, wx_vec, bx_vec, wp_mat)

    # Output is already channel-major: just unflatten the spatial dim (no transpose).
    return out.reshape(n, CFIN, ho, wo)


def reference_forward(x_nchw, torch_weights):
    """Pure-JAX reference mirroring the PyTorch forward (for self-check)."""
    w_exp, w_red, b_red, w_sexp, b_sexp, w_proj = torch_weights       # PyTorch (O,I,kh,kw)
    x = jnp.transpose(x_nchw, (0, 2, 3, 1)).astype(jnp.float32)
    n, h, w, cin = x.shape
    ho, pt, pb = _same_pad(h, KSIZE, STRIDE)
    wo, pw0, pw1 = _same_pad(w, KSIZE, STRIDE)
    xp = jnp.pad(x, ((0, 0), (pt, pb), (pw0, pw1), (0, 0)))
    y = lax.conv_general_dilated(
        xp, jnp.transpose(w_exp, (2, 3, 1, 0)), (STRIDE, STRIDE), 'VALID',
        dimension_numbers=('NHWC', 'HWIO', 'NHWC'))
    mu = jnp.mean(y, axis=(1, 2), keepdims=True)
    var = jnp.mean(jnp.square(y - mu), axis=(1, 2), keepdims=True)
    y = (y - mu) * lax.rsqrt(var + BN_EPS)
    y = y * jax.nn.sigmoid(y)
    s = jnp.mean(y, axis=(1, 2), keepdims=True)
    s = jnp.einsum('nhwc,oc->nhwo', s, w_red.reshape(CSQ, COUP)) + b_red
    s = s * jax.nn.sigmoid(s)
    s = jnp.einsum('nhwc,oc->nhwo', s, w_sexp.reshape(COUP, CSQ)) + b_sexp
    y = jax.nn.sigmoid(s) * y
    z = jnp.einsum('nhwc,oc->nhwo', y, w_proj.reshape(CFIN, COUP))
    mu2 = jnp.mean(z, axis=(1, 2), keepdims=True)
    var2 = jnp.mean(jnp.square(z - mu2), axis=(1, 2), keepdims=True)
    z = (z - mu2) * lax.rsqrt(var2 + BN_EPS)
    return jnp.transpose(z, (0, 3, 1, 2))


if __name__ == "__main__":
    key = jax.random.PRNGKey(0)
    ks = jax.random.split(key, 7)

    # deterministic synthetic inputs & parameters (PyTorch weight layouts)
    x = jax.random.normal(ks[0], (2, INPUT_FILTERS, 16, 16), jnp.float32)
    w_exp = jax.random.normal(ks[1], (COUP, INPUT_FILTERS, KSIZE, KSIZE), jnp.float32) * 0.1
    w_red = jax.random.normal(ks[2], (CSQ, COUP, 1, 1), jnp.float32) * 0.1
    b_red = jax.random.normal(ks[3], (CSQ,), jnp.float32) * 0.1
    w_sexp = jax.random.normal(ks[4], (COUP, CSQ, 1, 1), jnp.float32) * 0.1
    b_sexp = jax.random.normal(ks[5], (COUP,), jnp.float32) * 0.1
    w_proj = jax.random.normal(ks[6], (CFIN, COUP, 1, 1), jnp.float32) * 0.1

    # convert to kernel-friendly (channel-major) layouts — glue, done once
    we_mat = jnp.transpose(w_exp, (0, 2, 3, 1)).reshape(COUP, KKC)   # (Coup, K*K*Cin)
    wr_vec = w_red.reshape(COUP, 1)                                  # (Coup, 1)
    br_vec = b_red.reshape(1, 1)                                     # (1, 1)
    wx_vec = w_sexp.reshape(COUP, 1)                                 # (Coup, 1)
    bx_vec = b_sexp.reshape(COUP, 1)                                 # (Coup, 1)
    wp_mat = w_proj.reshape(CFIN, COUP)                              # (Cfin, Coup)
    params = (we_mat, wr_vec, br_vec, wx_vec, bx_vec, wp_mat)

    out = mbconv_forward(x, params)
    out = jax.block_until_ready(out)

    ref = reference_forward(x, (w_exp, w_red, b_red, w_sexp, b_sexp, w_proj))
    assert out.shape == (2, CFIN, 8, 8), out.shape
    max_err = float(jnp.max(jnp.abs(out - ref)))
    assert jnp.allclose(out, ref, atol=2e-3, rtol=2e-3), f"max_err={max_err}"
    print("KERNEL_OK")
</pallas_src>

<mosaic_0001>
module attributes {stable_mosaic.version = 11 : i64} {
  func.func @_mbconv_kernel(%arg0: i32, %arg1: memref<2x36x64xf32, #tpu.memory_space<vmem>>, %arg2: memref<24x36xf32, #tpu.memory_space<vmem>>, %arg3: memref<24x1xf32, #tpu.memory_space<vmem>>, %arg4: memref<1x1xf32, #tpu.memory_space<vmem>>, %arg5: memref<24x1xf32, #tpu.memory_space<vmem>>, %arg6: memref<24x1xf32, #tpu.memory_space<vmem>>, %arg7: memref<8x24xf32, #tpu.memory_space<vmem>>, %arg8: memref<2x8x64xf32, #tpu.memory_space<vmem>>) attributes {dimension_semantics = [#tpu.dimension_semantics<parallel>], iteration_bounds = array<i64: 1>, scalar_prefetch = 0 : i64, scratch_operands = 0 : i64, tpu.core_type = #tpu.core_type<tc>, window_params = [{transform_indices = @transform_0, window_bounds = array<i64: 2, 36, 64>}, {pipeline_mode = #tpu.pipeline_mode<synchronous>, transform_indices = @transform_1, window_bounds = array<i64: 24, 36>}, {pipeline_mode = #tpu.pipeline_mode<synchronous>, transform_indices = @transform_2, window_bounds = array<i64: 24, 1>}, {pipeline_mode = #tpu.pipeline_mode<synchronous>, transform_indices = @transform_3, window_bounds = array<i64: 1, 1>}, {pipeline_mode = #tpu.pipeline_mode<synchronous>, transform_indices = @transform_4, window_bounds = array<i64: 24, 1>}, {pipeline_mode = #tpu.pipeline_mode<synchronous>, transform_indices = @transform_5, window_bounds = array<i64: 24, 1>}, {pipeline_mode = #tpu.pipeline_mode<synchronous>, transform_indices = @transform_6, window_bounds = array<i64: 8, 24>}, {transform_indices = @transform_7, window_bounds = array<i64: 2, 8, 64>}]} {
    %c0 = arith.constant 0 : index
    %c0_0 = arith.constant 0 : index
    %0 = vector.load %arg2[%c0, %c0_0] : memref<24x36xf32, #tpu.memory_space<vmem>>, vector<24x36xf32>
    %c0_1 = arith.constant 0 : index
    %c0_2 = arith.constant 0 : index
    %1 = vector.load %arg3[%c0_1, %c0_2] : memref<24x1xf32, #tpu.memory_space<vmem>>, vector<24x1xf32>
    %c0_3 = arith.constant 0 : index
    %c0_4 = arith.constant 0 : index
    %2 = vector.load %arg4[%c0_3, %c0_4] : memref<1x1xf32, #tpu.memory_space<vmem>>, vector<1x1xf32>
    %c0_5 = arith.constant 0 : index
    %c0_6 = arith.constant 0 : index
    %3 = vector.load %arg5[%c0_5, %c0_6] : memref<24x1xf32, #tpu.memory_space<vmem>>, vector<24x1xf32>
    %c0_7 = arith.constant 0 : index
    %c0_8 = arith.constant 0 : index
    %4 = vector.load %arg6[%c0_7, %c0_8] : memref<24x1xf32, #tpu.memory_space<vmem>>, vector<24x1xf32>
    %c0_9 = arith.constant 0 : index
    %c0_10 = arith.constant 0 : index
    %5 = vector.load %arg7[%c0_9, %c0_10] : memref<8x24xf32, #tpu.memory_space<vmem>>, vector<8x24xf32>
    %c0_11 = arith.constant 0 : index
    %c0_12 = arith.constant 0 : index
    %c0_13 = arith.constant 0 : index
    %6 = vector.load %arg1[%c0_11, %c0_12, %c0_13] : memref<2x36x64xf32, #tpu.memory_space<vmem>>, vector<1x36x64xf32>
    %7 = vector.shape_cast %6 : vector<1x36x64xf32> to vector<36x64xf32>
    %cst = arith.constant dense<0.000000e+00> : vector<24x64xf32>
    %8 = tpu.matmul %0, %7, %cst {dimension_numbers = #tpu.dot_dimension_numbers<[1], [0], [0], [1], [0, 0, 1, 1], [], []>} : vector<24x36xf32>, vector<36x64xf32>, vector<24x64xf32> -> vector<24x64xf32>
    %cst_14 = arith.constant dense<0.000000e+00> : vector<24xf32>
    %9 = vector.multi_reduction <add>, %8, %cst_14 [1] : vector<24x64xf32> to vector<24xf32>
    %10 = vector.shape_cast %9 : vector<24xf32> to vector<24x1xf32>
    %cst_15 = arith.constant 6.400000e+01 : f32
    %11 = vector.broadcast %cst_15 : f32 to vector<24x1xf32>
    %12 = arith.divf %10, %11 : vector<24x1xf32>
    %13 = vector.broadcast %12 : vector<24x1xf32> to vector<24x64xf32>
    %14 = arith.subf %8, %13 : vector<24x64xf32>
    %15 = arith.mulf %14, %14 : vector<24x64xf32>
    %cst_16 = arith.constant dense<0.000000e+00> : vector<24xf32>
    %16 = vector.multi_reduction <add>, %15, %cst_16 [1] : vector<24x64xf32> to vector<24xf32>
    %17 = vector.shape_cast %16 : vector<24xf32> to vector<24x1xf32>
    %cst_17 = arith.constant 6.400000e+01 : f32
    %18 = vector.broadcast %cst_17 : f32 to vector<24x1xf32>
    %19 = arith.divf %17, %18 : vector<24x1xf32>
    %cst_18 = arith.constant 1.000000e-03 : f32
    %20 = vector.broadcast %cst_18 : f32 to vector<24x1xf32>
    %21 = arith.addf %19, %20 : vector<24x1xf32>
    %22 = math.rsqrt %21 : vector<24x1xf32>
    %23 = vector.broadcast %22 : vector<24x1xf32> to vector<24x64xf32>
    %24 = arith.mulf %14, %23 : vector<24x64xf32>
    %25 = arith.negf %24 : vector<24x64xf32>
    %26 = math.exp %25 : vector<24x64xf32>
    %cst_19 = arith.constant 1.000000e+00 : f32
    %27 = vector.broadcast %cst_19 : f32 to vector<24x64xf32>
    %28 = arith.addf %27, %26 : vector<24x64xf32>
    %29 = arith.divf %27, %28 : vector<24x64xf32>
    %30 = arith.mulf %24, %29 : vector<24x64xf32>
    %cst_20 = arith.constant dense<0.000000e+00> : vector<24xf32>
    %31 = vector.multi_reduction <add>, %30, %cst_20 [1] : vector<24x64xf32> to vector<24xf32>
    %32 = vector.shape_cast %31 : vector<24xf32> to vector<24x1xf32>
    %cst_21 = arith.constant 6.400000e+01 : f32
    %33 = vector.broadcast %cst_21 : f32 to vector<24x1xf32>
    %34 = arith.divf %32, %33 : vector<24x1xf32>
    %35 = arith.mulf %34, %1 : vector<24x1xf32>
    %cst_22 = arith.constant dense<0.000000e+00> : vector<1xf32>
    %36 = vector.multi_reduction <add>, %35, %cst_22 [0] : vector<24x1xf32> to vector<1xf32>
    %37 = vector.shape_cast %36 : vector<1xf32> to vector<1x1xf32>
    %38 = arith.addf %37, %2 : vector<1x1xf32>
    %39 = arith.negf %38 : vector<1x1xf32>
    %40 = math.exp %39 : vector<1x1xf32>
    %cst_23 = arith.constant 1.000000e+00 : f32
    %41 = vector.broadcast %cst_23 : f32 to vector<1x1xf32>
    %42 = arith.addf %41, %40 : vector<1x1xf32>
    %43 = arith.divf %41, %42 : vector<1x1xf32>
    %44 = arith.mulf %38, %43 : vector<1x1xf32>
    %45 = vector.broadcast %44 : vector<1x1xf32> to vector<24x1xf32>
    %46 = arith.mulf %45, %3 : vector<24x1xf32>
    %47 = arith.addf %46, %4 : vector<24x1xf32>
    %48 = arith.negf %47 : vector<24x1xf32>
    %49 = math.exp %48 : vector<24x1xf32>
    %cst_24 = arith.constant 1.000000e+00 : f32
    %50 = vector.broadcast %cst_24 : f32 to vector<24x1xf32>
    %51 = arith.addf %50, %49 : vector<24x1xf32>
    %52 = arith.divf %50, %51 : vector<24x1xf32>
    %53 = vector.broadcast %52 : vector<24x1xf32> to vector<24x64xf32>
    %54 = arith.mulf %53, %30 : vector<24x64xf32>
    %cst_25 = arith.constant dense<0.000000e+00> : vector<8x64xf32>
    %55 = tpu.matmul %5, %54, %cst_25 {dimension_numbers = #tpu.dot_dimension_numbers<[1], [0], [0], [1], [0, 0, 1, 1], [], []>} : vector<8x24xf32>, vector<24x64xf32>, vector<8x64xf32> -> vector<8x64xf32>
    %cst_26 = arith.constant dense<0.000000e+00> : vector<8xf32>
    %56 = vector.multi_reduction <add>, %55, %cst_26 [1] : vector<8x64xf32> to vector<8xf32>
    %57 = vector.shape_cast %56 : vector<8xf32> to vector<8x1xf32>
    %cst_27 = arith.constant 6.400000e+01 : f32
    %58 = vector.broadcast %cst_27 : f32 to vector<8x1xf32>
    %59 = arith.divf %57, %58 : vector<8x1xf32>
    %60 = vector.broadcast %59 : vector<8x1xf32> to vector<8x64xf32>
    %61 = arith.subf %55, %60 : vector<8x64xf32>
    %62 = arith.mulf %61, %61 : vector<8x64xf32>
    %cst_28 = arith.constant dense<0.000000e+00> : vector<8xf32>
    %63 = vector.multi_reduction <add>, %62, %cst_28 [1] : vector<8x64xf32> to vector<8xf32>
    %64 = vector.shape_cast %63 : vector<8xf32> to vector<8x1xf32>
    %cst_29 = arith.constant 6.400000e+01 : f32
    %65 = vector.broadcast %cst_29 : f32 to vector<8x1xf32>
    %66 = arith.divf %64, %65 : vector<8x1xf32>
    %cst_30 = arith.constant 1.000000e-03 : f32
    %67 = vector.broadcast %cst_30 : f32 to vector<8x1xf32>
    %68 = arith.addf %66, %67 : vector<8x1xf32>
    %69 = math.rsqrt %68 : vector<8x1xf32>
    %70 = vector.broadcast %69 : vector<8x1xf32> to vector<8x64xf32>
    %71 = arith.mulf %61, %70 : vector<8x64xf32>
    %c0_31 = arith.constant 0 : index
    %c0_32 = arith.constant 0 : index
    %c0_33 = arith.constant 0 : index
    %72 = vector.load %arg8[%c0_31, %c0_32, %c0_33] : memref<2x8x64xf32, #tpu.memory_space<vmem>>, vector<1x8x64xf32>
    %73 = vector.shape_cast %72 : vector<1x8x64xf32> to vector<8x64xf32>
    %74 = vector.shape_cast %71 : vector<8x64xf32> to vector<1x8x64xf32>
    tpu.vector_store %arg8[%c0_31, %c0_32, %c0_33], %74 {strides = array<i32>} : memref<2x8x64xf32, #tpu.memory_space<vmem>>, vector<1x8x64xf32>,
    %c1 = arith.constant 1 : index
    %c0_34 = arith.constant 0 : index
    %c0_35 = arith.constant 0 : index
    %75 = vector.load %arg1[%c1, %c0_34, %c0_35] : memref<2x36x64xf32, #tpu.memory_space<vmem>>, vector<1x36x64xf32>
    %76 = vector.shape_cast %75 : vector<1x36x64xf32> to vector<36x64xf32>
    %cst_36 = arith.constant dense<0.000000e+00> : vector<24x64xf32>
    %77 = tpu.matmul %0, %76, %cst_36 {dimension_numbers = #tpu.dot_dimension_numbers<[1], [0], [0], [1], [0, 0, 1, 1], [], []>} : vector<24x36xf32>, vector<36x64xf32>, vector<24x64xf32> -> vector<24x64xf32>
    %cst_37 = arith.constant dense<0.000000e+00> : vector<24xf32>
    %78 = vector.multi_reduction <add>, %77, %cst_37 [1] : vector<24x64xf32> to vector<24xf32>
    %79 = vector.shape_cast %78 : vector<24xf32> to vector<24x1xf32>
    %cst_38 = arith.constant 6.400000e+01 : f32
    %80 = vector.broadcast %cst_38 : f32 to vector<24x1xf32>
    %81 = arith.divf %79, %80 : vector<24x1xf32>
    %82 = vector.broadcast %81 : vector<24x1xf32> to vector<24x64xf32>
    %83 = arith.subf %77, %82 : vector<24x64xf32>
    %84 = arith.mulf %83, %83 : vector<24x64xf32>
    %cst_39 = arith.constant dense<0.000000e+00> : vector<24xf32>
    %85 = vector.multi_reduction <add>, %84, %cst_39 [1] : vector<24x64xf32> to vector<24xf32>
    %86 = vector.shape_cast %85 : vector<24xf32> to vector<24x1xf32>
    %cst_40 = arith.constant 6.400000e+01 : f32
    %87 = vector.broadcast %cst_40 : f32 to vector<24x1xf32>
    %88 = arith.divf %86, %87 : vector<24x1xf32>
    %cst_41 = arith.constant 1.000000e-03 : f32
    %89 = vector.broadcast %cst_41 : f32 to vector<24x1xf32>
    %90 = arith.addf %88, %89 : vector<24x1xf32>
    %91 = math.rsqrt %90 : vector<24x1xf32>
    %92 = vector.broadcast %91 : vector<24x1xf32> to vector<24x64xf32>
    %93 = arith.mulf %83, %92 : vector<24x64xf32>
    %94 = arith.negf %93 : vector<24x64xf32>
    %95 = math.exp %94 : vector<24x64xf32>
    %cst_42 = arith.constant 1.000000e+00 : f32
    %96 = vector.broadcast %cst_42 : f32 to vector<24x64xf32>
    %97 = arith.addf %96, %95 : vector<24x64xf32>
    %98 = arith.divf %96, %97 : vector<24x64xf32>
    %99 = arith.mulf %93, %98 : vector<24x64xf32>
    %cst_43 = arith.constant dense<0.000000e+00> : vector<24xf32>
    %100 = vector.multi_reduction <add>, %99, %cst_43 [1] : vector<24x64xf32> to vector<24xf32>
    %101 = vector.shape_cast %100 : vector<24xf32> to vector<24x1xf32>
    %cst_44 = arith.constant 6.400000e+01 : f32
    %102 = vector.broadcast %cst_44 : f32 to vector<24x1xf32>
    %103 = arith.divf %101, %102 : vector<24x1xf32>
    %104 = arith.mulf %103, %1 : vector<24x1xf32>
    %cst_45 = arith.constant dense<0.000000e+00> : vector<1xf32>
    %105 = vector.multi_reduction <add>, %104, %cst_45 [0] : vector<24x1xf32> to vector<1xf32>
    %106 = vector.shape_cast %105 : vector<1xf32> to vector<1x1xf32>
    %107 = arith.addf %106, %2 : vector<1x1xf32>
    %108 = arith.negf %107 : vector<1x1xf32>
    %109 = math.exp %108 : vector<1x1xf32>
    %cst_46 = arith.constant 1.000000e+00 : f32
    %110 = vector.broadcast %cst_46 : f32 to vector<1x1xf32>
    %111 = arith.addf %110, %109 : vector<1x1xf32>
    %112 = arith.divf %110, %111 : vector<1x1xf32>
    %113 = arith.mulf %107, %112 : vector<1x1xf32>
    %114 = vector.broadcast %113 : vector<1x1xf32> to vector<24x1xf32>
    %115 = arith.mulf %114, %3 : vector<24x1xf32>
    %116 = arith.addf %115, %4 : vector<24x1xf32>
    %117 = arith.negf %116 : vector<24x1xf32>
    %118 = math.exp %117 : vector<24x1xf32>
    %cst_47 = arith.constant 1.000000e+00 : f32
    %119 = vector.broadcast %cst_47 : f32 to vector<24x1xf32>
    %120 = arith.addf %119, %118 : vector<24x1xf32>
    %121 = arith.divf %119, %120 : vector<24x1xf32>
    %122 = vector.broadcast %121 : vector<24x1xf32> to vector<24x64xf32>
    %123 = arith.mulf %122, %99 : vector<24x64xf32>
    %cst_48 = arith.constant dense<0.000000e+00> : vector<8x64xf32>
    %124 = tpu.matmul %5, %123, %cst_48 {dimension_numbers = #tpu.dot_dimension_numbers<[1], [0], [0], [1], [0, 0, 1, 1], [], []>} : vector<8x24xf32>, vector<24x64xf32>, vector<8x64xf32> -> vector<8x64xf32>
    %cst_49 = arith.constant dense<0.000000e+00> : vector<8xf32>
    %125 = vector.multi_reduction <add>, %124, %cst_49 [1] : vector<8x64xf32> to vector<8xf32>
    %126 = vector.shape_cast %125 : vector<8xf32> to vector<8x1xf32>
    %cst_50 = arith.constant 6.400000e+01 : f32
    %127 = vector.broadcast %cst_50 : f32 to vector<8x1xf32>
    %128 = arith.divf %126, %127 : vector<8x1xf32>
    %129 = vector.broadcast %128 : vector<8x1xf32> to vector<8x64xf32>
    %130 = arith.subf %124, %129 : vector<8x64xf32>
    %131 = arith.mulf %130, %130 : vector<8x64xf32>
    %cst_51 = arith.constant dense<0.000000e+00> : vector<8xf32>
    %132 = vector.multi_reduction <add>, %131, %cst_51 [1] : vector<8x64xf32> to vector<8xf32>
    %133 = vector.shape_cast %132 : vector<8xf32> to vector<8x1xf32>
    %cst_52 = arith.constant 6.400000e+01 : f32
    %134 = vector.broadcast %cst_52 : f32 to vector<8x1xf32>
    %135 = arith.divf %133, %134 : vector<8x1xf32>
    %cst_53 = arith.constant 1.000000e-03 : f32
    %136 = vector.broadcast %cst_53 : f32 to vector<8x1xf32>
    %137 = arith.addf %135, %136 : vector<8x1xf32>
    %138 = math.rsqrt %137 : vector<8x1xf32>
    %139 = vector.broadcast %138 : vector<8x1xf32> to vector<8x64xf32>
    %140 = arith.mulf %130, %139 : vector<8x64xf32>
    %c1_54 = arith.constant 1 : index
    %c0_55 = arith.constant 0 : index
    %c0_56 = arith.constant 0 : index
    %141 = vector.load %arg8[%c1_54, %c0_55, %c0_56] : memref<2x8x64xf32, #tpu.memory_space<vmem>>, vector<1x8x64xf32>
    %142 = vector.shape_cast %141 : vector<1x8x64xf32> to vector<8x64xf32>
    %143 = vector.shape_cast %140 : vector<8x64xf32> to vector<1x8x64xf32>
    tpu.vector_store %arg8[%c1_54, %c0_55, %c0_56], %143 {strides = array<i32>} : memref<2x8x64xf32, #tpu.memory_space<vmem>>, vector<1x8x64xf32>,
    return
  }
  func.func @transform_0(%arg0: i32) -> (i32, i32, i32) {
    %c0_i32 = arith.constant 0 : i32
    %c0_i32_0 = arith.constant 0 : i32
    %c0_i32_1 = arith.constant 0 : i32
    return %arg0, %c0_i32, %c0_i32_0 : i32, i32, i32
  }
  func.func @transform_1(%arg0: i32) -> (i32, i32) {
    %c0_i32 = arith.constant 0 : i32
    %c0_i32_0 = arith.constant 0 : i32
    %c0_i32_1 = arith.constant 0 : i32
    return %c0_i32, %c0_i32_0 : i32, i32
  }
  func.func @transform_2(%arg0: i32) -> (i32, i32) {
    %c0_i32 = arith.constant 0 : i32
    %c0_i32_0 = arith.constant 0 : i32
    %c0_i32_1 = arith.constant 0 : i32
    return %c0_i32, %c0_i32_0 : i32, i32
  }
  func.func @transform_3(%arg0: i32) -> (i32, i32) {
    %c0_i32 = arith.constant 0 : i32
    %c0_i32_0 = arith.constant 0 : i32
    %c0_i32_1 = arith.constant 0 : i32
    return %c0_i32, %c0_i32_0 : i32, i32
  }
  func.func @transform_4(%arg0: i32) -> (i32, i32) {
    %c0_i32 = arith.constant 0 : i32
    %c0_i32_0 = arith.constant 0 : i32
    %c0_i32_1 = arith.constant 0 : i32
    return %c0_i32, %c0_i32_0 : i32, i32
  }
  func.func @transform_5(%arg0: i32) -> (i32, i32) {
    %c0_i32 = arith.constant 0 : i32
    %c0_i32_0 = arith.constant 0 : i32
    %c0_i32_1 = arith.constant 0 : i32
    return %c0_i32, %c0_i32_0 : i32, i32
  }
  func.func @transform_6(%arg0: i32) -> (i32, i32) {
    %c0_i32 = arith.constant 0 : i32
    %c0_i32_0 = arith.constant 0 : i32
    %c0_i32_1 = arith.constant 0 : i32
    return %c0_i32, %c0_i32_0 : i32, i32
  }
  func.func @transform_7(%arg0: i32) -> (i32, i32, i32) {
    %c0_i32 = arith.constant 0 : i32
    %c0_i32_0 = arith.constant 0 : i32
    %c0_i32_1 = arith.constant 0 : i32
    return %arg0, %c0_i32, %c0_i32_0 : i32, i32, i32
  }
}

</mosaic_0001>

<llo_original>
// kernel: mbconv_forward.1
$region0: #{mbconv_forward.1}
  #allocation0 [shape = 'u32[]', space=smem, size = 0x4, offset = 0x4, fixed_abs, tag = 'smem constant byte address 0x4 - core index']
  #allocation1 [shape = 'u32[72,128]{1,0:T(1,128)}', space=vmem, size = 0x9000, scoped, tag = 'internal scratch']
  #allocation2 [shape = 'f32[1,1]{1,0:T(1,128)S(1)}', space=vmem, size = 0x200, scoped, tag = 'scoped memory for mbconv_forward.1']
  %s0 = inlined_call_operand.vmem [shape: f32[2,36,64], index: 0, kind: input, shape index: {}]
  %s1 = inlined_call_operand.vmem [shape: f32[24,36], index: 1, kind: input, shape index: {}]
  %s2 = inlined_call_operand.vmem [shape: f32[24,1], index: 2, kind: input, shape index: {}]
  %s3 = inlined_call_operand.<no memory space> [shape: f32[1,1], index: 3, kind: input, shape index: {}]
  %s4 = inlined_call_operand.vmem [shape: f32[24,1], index: 4, kind: input, shape index: {}]
  %s5 = inlined_call_operand.vmem [shape: f32[24,1], index: 5, kind: input, shape index: {}]
  %s6 = inlined_call_operand.vmem [shape: f32[8,24], index: 6, kind: input, shape index: {}]
  %s7 = inlined_call_operand.vmem [shape: f32[2,8,64], index: 7, kind: output, shape index: {}]
  %s8 = sld [smem:[#allocation0]]
  $region38: #{mbconv_forward.1} parent=0
    _
  %s10 = ssub.s32 1, %s8
  %s11 = scalar_select 0, %s10, %s8
  %v12 = vstv %s3
  %13 = vst [vmem:[#allocation2] sm:$0x1] %v12
  // Predicated region
  $region2: #{mbconv_forward.1} parent=0 // pred_check
    _
  $region3: #{mbconv_forward.1} parent=0 // pred_check_branch
    %15 = sbr.rel (0) target = $region5
  $region4: #{mbconv_forward.1} parent=0 // pred_region
    _
  $region5: #{mbconv_forward.1} parent=0 // pred_fallthru
    _
  // Predicated region
  $region6: #{mbconv_forward.1} parent=0 // pred_check
    _
  $region7: #{mbconv_forward.1} parent=0 // pred_check_branch
    %17 = sbr.rel (0) target = $region9
  $region8: #{mbconv_forward.1} parent=0 // pred_region
    _
  $region9: #{mbconv_forward.1} parent=0 // pred_fallthru
    _
  // Predicated region
  $region10: #{mbconv_forward.1} parent=0 // pred_check
    _
  $region11: #{mbconv_forward.1} parent=0 // pred_check_branch
    %19 = sbr.rel (0) target = $region13
  $region12: #{mbconv_forward.1} parent=0 // pred_region
    _
  $region13: #{mbconv_forward.1} parent=0 // pred_fallthru
    _
  // Predicated region
  $region14: #{mbconv_forward.1} parent=0 // pred_check
    _
  $region15: #{mbconv_forward.1} parent=0 // pred_check_branch
    %21 = sbr.rel (0) target = $region17
  $region16: #{mbconv_forward.1} parent=0 // pred_region
    _
  $region17: #{mbconv_forward.1} parent=0 // pred_fallthru
    _
  // Predicated region
  $region18: #{mbconv_forward.1} parent=0 // pred_check
    _
  $region19: #{mbconv_forward.1} parent=0 // pred_check_branch
    %23 = sbr.rel (0) target = $region21
  $region20: #{mbconv_forward.1} parent=0 // pred_region
    _
  $region21: #{mbconv_forward.1} parent=0 // pred_fallthru
    _
  // Predicated region
  $region22: #{mbconv_forward.1} parent=0 // pred_check
    _
  $region23: #{mbconv_forward.1} parent=0 // pred_check_branch
    %25 = sbr.rel (0) target = $region25
  $region24: #{mbconv_forward.1} parent=0 // pred_region
    _
  $region25: #{mbconv_forward.1} parent=0 // pred_fallthru
    _
  // Predicated region
  $region26: #{mbconv_forward.1} parent=0 // pred_check
    _
  $region27: #{mbconv_forward.1} parent=0 // pred_check_branch
    %27 = sbr.rel (0) target = $region29
  $region28: #{mbconv_forward.1} parent=0 // pred_region
    _
  $region29: #{mbconv_forward.1} parent=0 // pred_fallthru
    _
  %v28 = vld [vmem:[%s1] sm:$0xff]
  %v29 = vld [vmem:[%s1 + $0x8] sm:$0xff]
  %v30 = vld [vmem:[%s1 + $0x10] sm:$0xff]
  %v31 = vld [vmem:[%s2] sm:$0xff]
  %v32 = vld [vmem:[%s2 + $0x8] sm:$0xff]
  %v33 = vld [vmem:[%s2 + $0x10] sm:$0xff]
  %v34 = vld [vmem:[#allocation2] sm:$0x1]
  %v35 = vld [vmem:[%s4] sm:$0xff]
  %v36 = vld [vmem:[%s4 + $0x8] sm:$0xff]
  %v37 = vld [vmem:[%s4 + $0x10] sm:$0xff]
  %v38 = vld [vmem:[%s5] sm:$0xff]
  %v39 = vld [vmem:[%s5 + $0x8] sm:$0xff]
  %v40 = vld [vmem:[%s5 + $0x10] sm:$0xff]
  %v41 = vld [vmem:[%s6] sm:$0xff]
  %v42 = vld [vmem:[%s0] sm:$0xff]
  %v43 = vld [vmem:[%s0 + $0x8] sm:$0xff]
  %v44 = vld [vmem:[%s0 + $0x10] sm:$0xff]
  %v45 = vld [vmem:[%s0 + $0x18] sm:$0xff]
  %v46 = vld [vmem:[%s0 + $0x20] sm:$0xf]
  %vm47 = vcmask 293888
  %v49 = vsel %vm47, %v28, 0
  %v52 = vsel %vm47, %v29, 0
  %v55 = vsel %vm47, %v30, 0
  %vm57 = vcmask 1043456
  %v59 = vsel %vm57, %v46, 0
  %61 = vmatpush.msra.mxu0 0.0
  %62 = vmatpush.msra.mxu0 0.0
  %63 = vmatpush.msra.mxu0 0.0
  %64 = vmatpush.msra.mxu0 0.0
  %65 = vmatpush.msra.mxu0 0.0
  %66 = vmatpush.msra.mxu0 0.0
  %67 = vmatpush.msra.mxu0 0.0
  %68 = vmatpush.msra.mxu0 0.0
  %69 = vmatpush.msra.mxu0 0.0
  %70 = vmatpush.msra.mxu0 0.0
  %71 = vmatpush.msra.mxu0 0.0
  %72 = vmatpush.msra.mxu0 %v59
  %73 = vmatpush.msra.mxu0 %v45
  %74 = vmatpush.msra.mxu0 %v44
  %75 = vmatpush.msra.mxu0 %v43
  %76 = vmatpush.msra.mxu0 %v42
  %77 = vmatmul.f32.gmra.mxu0 %v49
  %v78 = vpop.f32.mrf.mxu0
  %v79 = vadd.f32 0.0, %v78
  %80 = vmatmul.f32.gmra.mxu0 %v52
  %v81 = vpop.f32.mrf.mxu0
  %v82 = vadd.f32 0.0, %v81
  %83 = vmatmul.f32.gmra.mxu0 %v55
  %v84 = vpop.f32.mrf.mxu0
  %v85 = vadd.f32 0.0, %v84
  %86 = vdwg.mxu0
  %vm87 = vcmask 523264
  %v88 = vsel %vm87, %v79, 0.0
  %89 = vadd.xlane.f32.xlu0 %v88
  %v90 = vpop.xlane.xlu0 %89
  %v91 = vsel %vm87, %v82, 0.0
  %92 = vadd.xlane.f32.xlu0 %v91
  %v93 = vpop.xlane.xlu0 %92
  %v94 = vsel %vm87, %v85, 0.0
  %95 = vadd.xlane.f32.xlu0 %v94
  %v96 = vpop.xlane.xlu0 %95
  %v97 = vrcp.pop 64.0
  %v98 = vmul.f32 64.0, %v97
  %v99 = vsub.f32 1.0, %v98
  %v100 = vmul.f32 %v97, %v99
  %v101 = vadd.f32 %v97, %v100
  %vm102 = vweird.f32 %v97
  %v103 = vsel %vm102, %v97, %v101
  %v104 = vmul.f32 %v90, %v103
  %v105 = vmul.f32 %v93, %v103
  %v106 = vmul.f32 %v96, %v103
  %v107 = vsub.f32 %v79, %v104
  %v108 = vsub.f32 %v82, %v105
  %v109 = vsub.f32 %v85, %v106
  %v110 = vmul.f32 %v107, %v107
  %v111 = vmul.f32 %v108, %v108
  %v112 = vmul.f32 %v109, %v109
  %v113 = vsel %vm87, %v110, 0.0
  %114 = vadd.xlane.f32.xlu0 %v113
  %v115 = vpop.xlane.xlu0 %114
  %v116 = vsel %vm87, %v111, 0.0
  %117 = vadd.xlane.f32.xlu0 %v116
  %v118 = vpop.xlane.xlu0 %117
  %v119 = vsel %vm87, %v112, 0.0
  %120 = vadd.xlane.f32.xlu0 %v119
  %v121 = vpop.xlane.xlu0 %120
  %v122 = vmul.f32 %v115, %v103
  %v123 = vmul.f32 %v118, %v103
  %v124 = vmul.f32 %v121, %v103
  %v125 = vadd.f32 %v122, 0.001
  %v126 = vadd.f32 %v123, 0.001
  %v127 = vadd.f32 %v124, 0.001
  %v128 = vrsqrt.pop %v125
  %v129 = vmul.f32 %v128, %v125
  %v130 = vmul.f32 %v129, %v128
  %v131 = vmul.f32 0.5, %v130
  %v132 = vsub.f32 1.5, %v131
  %v133 = vmul.f32 %v128, %v132
  %vm134 = vweird.f32 %v125
  %vm135 = vweird.f32 %v128
  %vm136 = vmor %vm134, %vm135
  %v137 = vsel %vm136, %v128, %v133
  %v138 = vrsqrt.pop %v126
  %v139 = vmul.f32 %v138, %v126
  %v140 = vmul.f32 %v139, %v138
  %v141 = vmul.f32 0.5, %v140
  %v142 = vsub.f32 1.5, %v141
  %v143 = vmul.f32 %v138, %v142
  %vm144 = vweird.f32 %v126
  %vm145 = vweird.f32 %v138
  %vm146 = vmor %vm144, %vm145
  %v147 = vsel %vm146, %v138, %v143
  %v148 = vrsqrt.pop %v127
  %v149 = vmul.f32 %v148, %v127
  %v150 = vmul.f32 %v149, %v148
  %v151 = vmul.f32 0.5, %v150
  %v152 = vsub.f32 1.5, %v151
  %v153 = vmul.f32 %v148, %v152
  %vm154 = vweird.f32 %v127
  %vm155 = vweird.f32 %v148
  %vm156 = vmor %vm154, %vm155
  %v157 = vsel %vm156, %v148, %v153
  %v158 = vmul.f32 %v107, %v137
  %v159 = vmul.f32 %v108, %v147
  %v160 = vmul.f32 %v109, %v157
  %v161 = vxor.u32 %v158, 2147483648
  %v162 = vxor.u32 %v159, 2147483648
  %v163 = vxor.u32 %v160, 2147483648
  %v164 = vmul.f32 %v161, 1.442695
  %v165 = vpow.pop %v164
  %v166 = vmul.f32 %v162, 1.442695
  %v167 = vpow.pop %v166
  %v168 = vmul.f32 %v163, 1.442695
  %v169 = vpow.pop %v168
  %v170 = vadd.f32 %v165, 1.0
  %v171 = vadd.f32 %v167, 1.0
  %v172 = vadd.f32 %v169, 1.0
  %v173 = vrcp.pop %v170
  %v174 = vmul.f32 %v170, %v173
  %v175 = vsub.f32 1.0, %v174
  %v176 = vmul.f32 %v173, %v175
  %v177 = vadd.f32 %v173, %v176
  %vm178 = vweird.f32 %v170
  %vm179 = vweird.f32 %v173
  %vm180 = vmor %vm178, %vm179
  %v181 = vsel %vm180, %v173, %v177
  %v182 = vand.u32 2147483647, %v170
  %vm183 = vcmp.eq.f32.partialorder %v182, 8.507059e+37
  %v184 = vand.u32 %v170, 2147483648
  %v185 = vor.u32 1.1754944e-38, %v184
  %v186 = vsel %vm183, %v185, %v181
  %v187 = vmul.f32 1.0, %v186
  %v188 = vrcp.pop %v171
  %v189 = vmul.f32 %v171, %v188
  %v190 = vsub.f32 1.0, %v189
  %v191 = vmul.f32 %v188, %v190
  %v192 = vadd.f32 %v188, %v191
  %vm193 = vweird.f32 %v171
  %vm194 = vweird.f32 %v188
  %vm195 = vmor %vm193, %vm194
  %v196 = vsel %vm195, %v188, %v192
  %v197 = vand.u32 2147483647, %v171
  %vm198 = vcmp.eq.f32.partialorder %v197, 8.507059e+37
  %v199 = vand.u32 %v171, 2147483648
  %v200 = vor.u32 1.1754944e-38, %v199
  %v201 = vsel %vm198, %v200, %v196
  %v202 = vmul.f32 1.0, %v201
  %v203 = vrcp.pop %v172
  %v204 = vmul.f32 %v172, %v203
  %v205 = vsub.f32 1.0, %v204
  %v206 = vmul.f32 %v203, %v205
  %v207 = vadd.f32 %v203, %v206
  %vm208 = vweird.f32 %v172
  %vm209 = vweird.f32 %v203
  %vm210 = vmor %vm208, %vm209
  %v211 = vsel %vm210, %v203, %v207
  %v212 = vand.u32 2147483647, %v172
  %vm213 = vcmp.eq.f32.partialorder %v212, 8.507059e+37
  %v214 = vand.u32 %v172, 2147483648
  %v215 = vor.u32 1.1754944e-38, %v214
  %v216 = vsel %vm213, %v215, %v211
  %v217 = vmul.f32 1.0, %v216
  %v218 = vmul.f32 %v158, %v187
  %v219 = vmul.f32 %v159, %v202
  %v220 = vmul.f32 %v160, %v217
  %v221 = vsel %vm87, %v218, 0.0
  %222 = vadd.xlane.f32.xlu0 %v221
  %v223 = vpop.xlane.xlu0 %222
  %v224 = vsel %vm87, %v219, 0.0
  %225 = vadd.xlane.f32.xlu0 %v224
  %v226 = vpop.xlane.xlu0 %225
  %v227 = vsel %vm87, %v220, 0.0
  %228 = vadd.xlane.f32.xlu0 %v227
  %v229 = vpop.xlane.xlu0 %228
  %v230 = vmul.f32 %v223, %v103
  %v231 = vmul.f32 %v226, %v103
  %v232 = vmul.f32 %v229, %v103
  %v233 = vmul.f32 %v230, %v31
  %v234 = vmul.f32 %v231, %v32
  %v235 = vmul.f32 %v232, %v33
  %vm236 = vcmask 7168
  %v237 = vsel %vm236, %v233, 0.0
  %v238 = vsel %vm236, %v234, 0.0
  %v239 = vadd.f32 %v237, %v238
  %v240 = vsel %vm236, %v235, 0.0
  %v241 = vadd.f32 %v239, %v240
  %v242 = vrot.slane %v241, 4
  %v243 = vadd.f32 %v241, %v242
  %v244 = vrot.slane %v243, 2
  %v245 = vadd.f32 %v243, %v244
  %v246 = vrot.slane %v245, 1
  %v247 = vadd.f32 %v245, %v246
  %v248 = vadd.f32 %v247, %v34
  %v249 = vxor.u32 %v248, 2147483648
  %v250 = vmul.f32 %v249, 1.442695
  %v251 = vpow.pop %v250
  %v252 = vadd.f32 %v251, 1.0
  %v253 = vrcp.pop %v252
  %v254 = vmul.f32 %v252, %v253
  %v255 = vsub.f32 1.0, %v254
  %v256 = vmul.f32 %v253, %v255
  %v257 = vadd.f32 %v253, %v256
  %vm258 = vweird.f32 %v252
  %vm259 = vweird.f32 %v253
  %vm260 = vmor %vm258, %vm259
  %v261 = vsel %vm260, %v253, %v257
  %v262 = vand.u32 2147483647, %v252
  %vm263 = vcmp.eq.f32.partialorder %v262, 8.507059e+37
  %v264 = vand.u32 %v252, 2147483648
  %v265 = vor.u32 1.1754944e-38, %v264
  %v266 = vsel %vm263, %v265, %v261
  %v267 = vmul.f32 1.0, %v266
  %v268 = vmul.f32 %v248, %v267
  %v269 = vperm.slane %v268, 0
  %v270 = vmul.f32 %v269, %v35
  %v271 = vmul.f32 %v269, %v36
  %v272 = vmul.f32 %v269, %v37
  %v273 = vadd.f32 %v270, %v38
  %v274 = vadd.f32 %v271, %v39
  %v275 = vadd.f32 %v272, %v40
  %v276 = vxor.u32 %v273, 2147483648
  %v277 = vxor.u32 %v274, 2147483648
  %v278 = vxor.u32 %v275, 2147483648
  %v279 = vmul.f32 %v276, 1.442695
  %v280 = vpow.pop %v279
  %v281 = vmul.f32 %v277, 1.442695
  %v282 = vpow.pop %v281
  %v283 = vmul.f32 %v278, 1.442695
  %v284 = vpow.pop %v283
  %v285 = vadd.f32 %v280, 1.0
  %v286 = vadd.f32 %v282, 1.0
  %v287 = vadd.f32 %v284, 1.0
  %v288 = vrcp.pop %v285
  %v289 = vmul.f32 %v285, %v288
  %v290 = vsub.f32 1.0, %v289
  %v291 = vmul.f32 %v288, %v290
  %v292 = vadd.f32 %v288, %v291
  %vm293 = vweird.f32 %v285
  %vm294 = vweird.f32 %v288
  %vm295 = vmor %vm293, %vm294
  %v296 = vsel %vm295, %v288, %v292
  %v297 = vand.u32 2147483647, %v285
  %vm298 = vcmp.eq.f32.partialorder %v297, 8.507059e+37
  %v299 = vand.u32 %v285, 2147483648
  %v300 = vor.u32 1.1754944e-38, %v299
  %v301 = vsel %vm298, %v300, %v296
  %v302 = vmul.f32 1.0, %v301
  %v303 = vrcp.pop %v286
  %v304 = vmul.f32 %v286, %v303
  %v305 = vsub.f32 1.0, %v304
  %v306 = vmul.f32 %v303, %v305
  %v307 = vadd.f32 %v303, %v306
  %vm308 = vweird.f32 %v286
  %vm309 = vweird.f32 %v303
  %vm310 = vmor %vm308, %vm309
  %v311 = vsel %vm310, %v303, %v307
  %v312 = vand.u32 2147483647, %v286
  %vm313 = vcmp.eq.f32.partialorder %v312, 8.507059e+37
  %v314 = vand.u32 %v286, 2147483648
  %v315 = vor.u32 1.1754944e-38, %v314
  %v316 = vsel %vm313, %v315, %v311
  %v317 = vmul.f32 1.0, %v316
  %v318 = vrcp.pop %v287
  %v319 = vmul.f32 %v287, %v318
  %v320 = vsub.f32 1.0, %v319
  %v321 = vmul.f32 %v318, %v320
  %v322 = vadd.f32 %v318, %v321
  %vm323 = vweird.f32 %v287
  %vm324 = vweird.f32 %v318
  %vm325 = vmor %vm323, %vm324
  %v326 = vsel %vm325, %v318, %v322
  %v327 = vand.u32 2147483647, %v287
  %vm328 = vcmp.eq.f32.partialorder %v327, 8.507059e+37
  %v329 = vand.u32 %v287, 2147483648
  %v330 = vor.u32 1.1754944e-38, %v329
  %v331 = vsel %vm328, %v330, %v326
  %v332 = vmul.f32 1.0, %v331
  %334 = vset.pattern.permute.xlu0 0
  %335 = vperm.xlu0 %334, %v302
  %v336 = vpop.permute.xlu0 %335
  %339 = vset.pattern.permute.xlu0 0
  %340 = vperm.xlu0 %339, %v317
  %v341 = vpop.permute.xlu0 %340
  %344 = vset.pattern.permute.xlu0 0
  %345 = vperm.xlu0 %344, %v332
  %v346 = vpop.permute.xlu0 %345
  %v348 = vmul.f32 %v336, %v218
  %v349 = vmul.f32 %v341, %v219
  %v350 = vmul.f32 %v346, %v220
  %vm351 = vcmask 195584
  %v353 = vsel %vm351, %v41, 0
  %355 = vmatpush.msra.mxu0 0.0
  %356 = vmatpush.msra.mxu0 0.0
  %357 = vmatpush.msra.mxu0 0.0
  %358 = vmatpush.msra.mxu0 0.0
  %359 = vmatpush.msra.mxu0 0.0
  %360 = vmatpush.msra.mxu0 0.0
  %361 = vmatpush.msra.mxu0 0.0
  %362 = vmatpush.msra.mxu0 0.0
  %363 = vmatpush.msra.mxu0 0.0
  %364 = vmatpush.msra.mxu0 0.0
  %365 = vmatpush.msra.mxu0 0.0
  %366 = vmatpush.msra.mxu0 0.0
  %367 = vmatpush.msra.mxu0 0.0
  %368 = vmatpush.msra.mxu0 %v350
  %369 = vmatpush.msra.mxu0 %v349
  %370 = vmatpush.msra.mxu0 %v348
  %371 = vmatmul.f32.gmra.mxu0 %v353
  %v372 = vpop.f32.mrf.mxu0
  %v373 = vadd.f32 0.0, %v372
  %374 = vdwg.mxu0
  %v375 = vsel %vm87, %v373, 0.0
  %376 = vadd.xlane.f32.xlu0 %v375
  %v377 = vpop.xlane.xlu0 %376
  %v378 = vmul.f32 %v377, %v103
  %v379 = vsub.f32 %v373, %v378
  %v380 = vmul.f32 %v379, %v379
  %v381 = vsel %vm87, %v380, 0.0
  %382 = vadd.xlane.f32.xlu0 %v381
  %v383 = vpop.xlane.xlu0 %382
  %v384 = vmul.f32 %v383, %v103
  %v385 = vadd.f32 %v384, 0.001
  %v386 = vrsqrt.pop %v385
  %v387 = vmul.f32 %v386, %v385
  %v388 = vmul.f32 %v387, %v386
  %v389 = vmul.f32 0.5, %v388
  %v390 = vsub.f32 1.5, %v389
  %v391 = vmul.f32 %v386, %v390
  %vm392 = vweird.f32 %v385
  %vm393 = vweird.f32 %v386
  %vm394 = vmor %vm392, %vm393
  %v395 = vsel %vm394, %v386, %v391
  %v396 = vmul.f32 %v379, %v395
  %397 = vst.msk [vmem:[%s7] sm:$0xff] %vm87, %v396
  %s398 = scalar_lea.vmem %s0, 40
  %v399 = vld [vmem:[%s398] sm:$0xff]
  %v400 = vld [vmem:[%s398 + $0x8] sm:$0xff]
  %v401 = vld [vmem:[%s398 + $0x10] sm:$0xff]
  %v402 = vld [vmem:[%s398 + $0x18] sm:$0xff]
  %v403 = vld [vmem:[%s398 + $0x20] sm:$0xf]
  %v405 = vsel %vm57, %v403, 0
  %407 = vmatpush.msra.mxu0 0.0
  %408 = vmatpush.msra.mxu0 0.0
  %409 = vmatpush.msra.mxu0 0.0
  %410 = vmatpush.msra.mxu0 0.0
  %411 = vmatpush.msra.mxu0 0.0
  %412 = vmatpush.msra.mxu0 0.0
  %413 = vmatpush.msra.mxu0 0.0
  %414 = vmatpush.msra.mxu0 0.0
  %415 = vmatpush.msra.mxu0 0.0
  %416 = vmatpush.msra.mxu0 0.0
  %417 = vmatpush.msra.mxu0 0.0
  %418 = vmatpush.msra.mxu0 %v405
  %419 = vmatpush.msra.mxu0 %v402
  %420 = vmatpush.msra.mxu0 %v401
  %421 = vmatpush.msra.mxu0 %v400
  %422 = vmatpush.msra.mxu0 %v399
  %423 = vmatmul.f32.gmra.mxu0 %v49
  %v424 = vpop.f32.mrf.mxu0
  %v425 = vadd.f32 0.0, %v424
  %426 = vmatmul.f32.gmra.mxu0 %v52
  %v427 = vpop.f32.mrf.mxu0
  %v428 = vadd.f32 0.0, %v427
  %429 = vmatmul.f32.gmra.mxu0 %v55
  %v430 = vpop.f32.mrf.mxu0
  %v431 = vadd.f32 0.0, %v430
  %432 = vdwg.mxu0
  %v433 = vsel %vm87, %v425, 0.0
  %434 = vadd.xlane.f32.xlu0 %v433
  %v435 = vpop.xlane.xlu0 %434
  %v436 = vsel %vm87, %v428, 0.0
  %437 = vadd.xlane.f32.xlu0 %v436
  %v438 = vpop.xlane.xlu0 %437
  %v439 = vsel %vm87, %v431, 0.0
  %440 = vadd.xlane.f32.xlu0 %v439
  %v441 = vpop.xlane.xlu0 %440
  %v442 = vmul.f32 %v435, %v103
  %v443 = vmul.f32 %v438, %v103
  %v444 = vmul.f32 %v441, %v103
  %v445 = vsub.f32 %v425, %v442
  %v446 = vsub.f32 %v428, %v443
  %v447 = vsub.f32 %v431, %v444
  %v448 = vmul.f32 %v445, %v445
  %v449 = vmul.f32 %v446, %v446
  %v450 = vmul.f32 %v447, %v447
  %v451 = vsel %vm87, %v448, 0.0
  %452 = vadd.xlane.f32.xlu0 %v451
  %v453 = vpop.xlane.xlu0 %452
  %v454 = vsel %vm87, %v449, 0.0
  %455 = vadd.xlane.f32.xlu0 %v454
  %v456 = vpop.xlane.xlu0 %455
  %v457 = vsel %vm87, %v450, 0.0
  %458 = vadd.xlane.f32.xlu0 %v457
  %v459 = vpop.xlane.xlu0 %458
  %v460 = vmul.f32 %v453, %v103
  %v461 = vmul.f32 %v456, %v103
  %v462 = vmul.f32 %v459, %v103
  %v463 = vadd.f32 %v460, 0.001
  %v464 = vadd.f32 %v461, 0.001
  %v465 = vadd.f32 %v462, 0.001
  %v466 = vrsqrt.pop %v463
  %v467 = vmul.f32 %v466, %v463
  %v468 = vmul.f32 %v467, %v466
  %v469 = vmul.f32 0.5, %v468
  %v470 = vsub.f32 1.5, %v469
  %v471 = vmul.f32 %v466, %v470
  %vm472 = vweird.f32 %v463
  %vm473 = vweird.f32 %v466
  %vm474 = vmor %vm472, %vm473
  %v475 = vsel %vm474, %v466, %v471
  %v476 = vrsqrt.pop %v464
  %v477 = vmul.f32 %v476, %v464
  %v478 = vmul.f32 %v477, %v476
  %v479 = vmul.f32 0.5, %v478
  %v480 = vsub.f32 1.5, %v479
  %v481 = vmul.f32 %v476, %v480
  %vm482 = vweird.f32 %v464
  %vm483 = vweird.f32 %v476
  %vm484 = vmor %vm482, %vm483
  %v485 = vsel %vm484, %v476, %v481
  %v486 = vrsqrt.pop %v465
  %v487 = vmul.f32 %v486, %v465
  %v488 = vmul.f32 %v487, %v486
  %v489 = vmul.f32 0.5, %v488
  %v490 = vsub.f32 1.5, %v489
  %v491 = vmul.f32 %v486, %v490
  %vm492 = vweird.f32 %v465
  %vm493 = vweird.f32 %v486
  %vm494 = vmor %vm492, %vm493
  %v495 = vsel %vm494, %v486, %v491
  %v496 = vmul.f32 %v445, %v475
  %v497 = vmul.f32 %v446, %v485
  %v498 = vmul.f32 %v447, %v495
  %v499 = vxor.u32 %v496, 2147483648
  %v500 = vxor.u32 %v497, 2147483648
  %v501 = vxor.u32 %v498, 2147483648
  %v502 = vmul.f32 %v499, 1.442695
  %v503 = vpow.pop %v502
  %v504 = vmul.f32 %v500, 1.442695
  %v505 = vpow.pop %v504
  %v506 = vmul.f32 %v501, 1.442695
  %v507 = vpow.pop %v506
  %v508 = vadd.f32 %v503, 1.0
  %v509 = vadd.f32 %v505, 1.0
  %v510 = vadd.f32 %v507, 1.0
  %v511 = vrcp.pop %v508
  %v512 = vmul.f32 %v508, %v511
  %v513 = vsub.f32 1.0, %v512
  %v514 = vmul.f32 %v511, %v513
  %v515 = vadd.f32 %v511, %v514
  %vm516 = vweird.f32 %v508
  %vm517 = vweird.f32 %v511
  %vm518 = vmor %vm516, %vm517
  %v519 = vsel %vm518, %v511, %v515
  %v520 = vand.u32 2147483647, %v508
  %vm521 = vcmp.eq.f32.partialorder %v520, 8.507059e+37
  %v522 = vand.u32 %v508, 2147483648
  %v523 = vor.u32 1.1754944e-38, %v522
  %v524 = vsel %vm521, %v523, %v519
  %v525 = vmul.f32 1.0, %v524
  %v526 = vrcp.pop %v509
  %v527 = vmul.f32 %v509, %v526
  %v528 = vsub.f32 1.0, %v527
  %v529 = vmul.f32 %v526, %v528
  %v530 = vadd.f32 %v526, %v529
  %vm531 = vweird.f32 %v509
  %vm532 = vweird.f32 %v526
  %vm533 = vmor %vm531, %vm532
  %v534 = vsel %vm533, %v526, %v530
  %v535 = vand.u32 2147483647, %v509
  %vm536 = vcmp.eq.f32.partialorder %v535, 8.507059e+37
  %v537 = vand.u32 %v509, 2147483648
  %v538 = vor.u32 1.1754944e-38, %v537
  %v539 = vsel %vm536, %v538, %v534
  %v540 = vmul.f32 1.0, %v539
  %v541 = vrcp.pop %v510
  %v542 = vmul.f32 %v510, %v541
  %v543 = vsub.f32 1.0, %v542
  %v544 = vmul.f32 %v541, %v543
  %v545 = vadd.f32 %v541, %v544
  %vm546 = vweird.f32 %v510
  %vm547 = vweird.f32 %v541
  %vm548 = vmor %vm546, %vm547
  %v549 = vsel %vm548, %v541, %v545
  %v550 = vand.u32 2147483647, %v510
  %vm551 = vcmp.eq.f32.partialorder %v550, 8.507059e+37
  %v552 = vand.u32 %v510, 2147483648
  %v553 = vor.u32 1.1754944e-38, %v552
  %v554 = vsel %vm551, %v553, %v549
  %v555 = vmul.f32 1.0, %v554
  %v556 = vmul.f32 %v496, %v525
  %v557 = vmul.f32 %v497, %v540
  %v558 = vmul.f32 %v498, %v555
  %v559 = vsel %vm87, %v556, 0.0
  %560 = vadd.xlane.f32.xlu0 %v559
  %v561 = vpop.xlane.xlu0 %560
  %v562 = vsel %vm87, %v557, 0.0
  %563 = vadd.xlane.f32.xlu0 %v562
  %v564 = vpop.xlane.xlu0 %563
  %v565 = vsel %vm87, %v558, 0.0
  %566 = vadd.xlane.f32.xlu0 %v565
  %v567 = vpop.xlane.xlu0 %566
  %v568 = vmul.f32 %v561, %v103
  %v569 = vmul.f32 %v564, %v103
  %v570 = vmul.f32 %v567, %v103
  %v571 = vmul.f32 %v568, %v31
  %v572 = vmul.f32 %v569, %v32
  %v573 = vmul.f32 %v570, %v33
  %v574 = vsel %vm236, %v571, 0.0
  %v575 = vsel %vm236, %v572, 0.0
  %v576 = vadd.f32 %v574, %v575
  %v577 = vsel %vm236, %v573, 0.0
  %v578 = vadd.f32 %v576, %v577
  %v579 = vrot.slane %v578, 4
  %v580 = vadd.f32 %v578, %v579
  %v581 = vrot.slane %v580, 2
  %v582 = vadd.f32 %v580, %v581
  %v583 = vrot.slane %v582, 1
  %v584 = vadd.f32 %v582, %v583
  %v585 = vadd.f32 %v584, %v34
  %v586 = vxor.u32 %v585, 2147483648
  %v587 = vmul.f32 %v586, 1.442695
  %v588 = vpow.pop %v587
  %v589 = vadd.f32 %v588, 1.0
  %v590 = vrcp.pop %v589
  %v591 = vmul.f32 %v589, %v590
  %v592 = vsub.f32 1.0, %v591
  %v593 = vmul.f32 %v590, %v592
  %v594 = vadd.f32 %v590, %v593
  %vm595 = vweird.f32 %v589
  %vm596 = vweird.f32 %v590
  %vm597 = vmor %vm595, %vm596
  %v598 = vsel %vm597, %v590, %v594
  %v599 = vand.u32 2147483647, %v589
  %vm600 = vcmp.eq.f32.partialorder %v599, 8.507059e+37
  %v601 = vand.u32 %v589, 2147483648
  %v602 = vor.u32 1.1754944e-38, %v601
  %v603 = vsel %vm600, %v602, %v598
  %v604 = vmul.f32 1.0, %v603
  %v605 = vmul.f32 %v585, %v604
  %v606 = vperm.slane %v605, 0
  %v607 = vmul.f32 %v606, %v35
  %v608 = vmul.f32 %v606, %v36
  %v609 = vmul.f32 %v606, %v37
  %v610 = vadd.f32 %v607, %v38
  %v611 = vadd.f32 %v608, %v39
  %v612 = vadd.f32 %v609, %v40
  %v613 = vxor.u32 %v610, 2147483648
  %v614 = vxor.u32 %v611, 2147483648
  %v615 = vxor.u32 %v612, 2147483648
  %v616 = vmul.f32 %v613, 1.442695
  %v617 = vpow.pop %v616
  %v618 = vmul.f32 %v614, 1.442695
  %v619 = vpow.pop %v618
  %v620 = vmul.f32 %v615, 1.442695
  %v621 = vpow.pop %v620
  %v622 = vadd.f32 %v617, 1.0
  %v623 = vadd.f32 %v619, 1.0
  %v624 = vadd.f32 %v621, 1.0
  %v625 = vrcp.pop %v622
  %v626 = vmul.f32 %v622, %v625
  %v627 = vsub.f32 1.0, %v626
  %v628 = vmul.f32 %v625, %v627
  %v629 = vadd.f32 %v625, %v628
  %vm630 = vweird.f32 %v622
  %vm631 = vweird.f32 %v625
  %vm632 = vmor %vm630, %vm631
  %v633 = vsel %vm632, %v625, %v629
  %v634 = vand.u32 2147483647, %v622
  %vm635 = vcmp.eq.f32.partialorder %v634, 8.507059e+37
  %v636 = vand.u32 %v622, 2147483648
  %v637 = vor.u32 1.1754944e-38, %v636
  %v638 = vsel %vm635, %v637, %v633
  %v639 = vmul.f32 1.0, %v638
  %v640 = vrcp.pop %v623
  %v641 = vmul.f32 %v623, %v640
  %v642 = vsub.f32 1.0, %v641
  %v643 = vmul.f32 %v640, %v642
  %v644 = vadd.f32 %v640, %v643
  %vm645 = vweird.f32 %v623
  %vm646 = vweird.f32 %v640
  %vm647 = vmor %vm645, %vm646
  %v648 = vsel %vm647, %v640, %v644
  %v649 = vand.u32 2147483647, %v623
  %vm650 = vcmp.eq.f32.partialorder %v649, 8.507059e+37
  %v651 = vand.u32 %v623, 2147483648
  %v652 = vor.u32 1.1754944e-38, %v651
  %v653 = vsel %vm650, %v652, %v648
  %v654 = vmul.f32 1.0, %v653
  %v655 = vrcp.pop %v624
  %v656 = vmul.f32 %v624, %v655
  %v657 = vsub.f32 1.0, %v656
  %v658 = vmul.f32 %v655, %v657
  %v659 = vadd.f32 %v655, %v658
  %vm660 = vweird.f32 %v624
  %vm661 = vweird.f32 %v655
  %vm662 = vmor %vm660, %vm661
  %v663 = vsel %vm662, %v655, %v659
  %v664 = vand.u32 2147483647, %v624
  %vm665 = vcmp.eq.f32.partialorder %v664, 8.507059e+37
  %v666 = vand.u32 %v624, 2147483648
  %v667 = vor.u32 1.1754944e-38, %v666
  %v668 = vsel %vm665, %v667, %v663
  %v669 = vmul.f32 1.0, %v668
  %671 = vset.pattern.permute.xlu0 0
  %672 = vperm.xlu0 %671, %v639
  %v673 = vpop.permute.xlu0 %672
  %676 = vset.pattern.permute.xlu0 0
  %677 = vperm.xlu0 %676, %v654
  %v678 = vpop.permute.xlu0 %677
  %681 = vset.pattern.permute.xlu0 0
  %682 = vperm.xlu0 %681, %v669
  %v683 = vpop.permute.xlu0 %682
  %v685 = vmul.f32 %v673, %v556
  %v686 = vmul.f32 %v678, %v557
  %v687 = vmul.f32 %v683, %v558
  %688 = vmatpush.msra.mxu0 0.0
  %689 = vmatpush.msra.mxu0 0.0
  %690 = vmatpush.msra.mxu0 0.0
  %691 = vmatpush.msra.mxu0 0.0
  %692 = vmatpush.msra.mxu0 0.0
  %693 = vmatpush.msra.mxu0 0.0
  %694 = vmatpush.msra.mxu0 0.0
  %695 = vmatpush.msra.mxu0 0.0
  %696 = vmatpush.msra.mxu0 0.0
  %697 = vmatpush.msra.mxu0 0.0
  %698 = vmatpush.msra.mxu0 0.0
  %699 = vmatpush.msra.mxu0 0.0
  %700 = vmatpush.msra.mxu0 0.0
  %701 = vmatpush.msra.mxu0 %v687
  %702 = vmatpush.msra.mxu0 %v686
  %703 = vmatpush.msra.mxu0 %v685
  %704 = vmatmul.f32.gmra.mxu0 %v353
  %v705 = vpop.f32.mrf.mxu0
  %v706 = vadd.f32 0.0, %v705
  %707 = vdwg.mxu0
  %v708 = vsel %vm87, %v706, 0.0
  %709 = vadd.xlane.f32.xlu0 %v708
  %v710 = vpop.xlane.xlu0 %709
  %v711 = vmul.f32 %v710, %v103
  %v712 = vsub.f32 %v706, %v711
  %v713 = vmul.f32 %v712, %v712
  %v714 = vsel %vm87, %v713, 0.0
  %715 = vadd.xlane.f32.xlu0 %v714
  %v716 = vpop.xlane.xlu0 %715
  %v717 = vmul.f32 %v716, %v103
  %v718 = vadd.f32 %v717, 0.001
  %v719 = vrsqrt.pop %v718
  %v720 = vmul.f32 %v719, %v718
  %v721 = vmul.f32 %v720, %v719
  %v722 = vmul.f32 0.5, %v721
  %v723 = vsub.f32 1.5, %v722
  %v724 = vmul.f32 %v719, %v723
  %vm725 = vweird.f32 %v718
  %vm726 = vweird.f32 %v719
  %vm727 = vmor %vm725, %vm726
  %v728 = vsel %vm727, %v719, %v724
  %v729 = vmul.f32 %v712, %v728
  %s730 = scalar_lea.vmem %s7, 8
  %731 = vst.msk [vmem:[%s730] sm:$0xff] %vm87, %v729
  // Predicated region
  $region30: #{mbconv_forward.1} parent=0 // pred_check
    _
  $region31: #{mbconv_forward.1} parent=0 // pred_check_branch
    %733 = sbr.rel (0) target = $region33
  $region32: #{mbconv_forward.1} parent=0 // pred_region
    _
  $region33: #{mbconv_forward.1} parent=0 // pred_fallthru
    _
  // Predicated region
  $region34: #{mbconv_forward.1} parent=0 // pred_check
    _
  $region35: #{mbconv_forward.1} parent=0 // pred_check_branch
    %735 = sbr.rel (0) target = $region37
  $region36: #{mbconv_forward.1} parent=0 // pred_region
    _
  $region37: #{mbconv_forward.1} parent=0 // pred_fallthru
    _

</llo_original>
